<compile_context>
chip_gen: v6e
topology: v6e:2x2x1
jax: 0.10.0
libtpu: 0.0.40
codegen_flags: <defaults>
</compile_context>

<pallas_src>
import functools

import jax
import jax.numpy as jnp
from jax.experimental import pallas as pl
from jax.experimental.pallas import tpu as pltpu


def _round_up(x, m):
    return ((x + m - 1) // m) * m


def _resblock_kernel(g_ref, r_ref, wc_ref, ws_ref, shift_ref, g_out_ref, r_out_ref,
                     *, c_out_p, tile_l, has_skip):
    """One (batch element, L-tile) step, both branches.

    g_ref, r_ref : (1, Cin_p, Lin)    bf16 padded NCL inputs (1 halo col left, >=127 right)
    wc_ref       : (2, Cc1, Cin_p)    bf16 center-tap weights (BN scale folded);
                                      if has_skip, rows [Cout_p:] are the 1x1 skip conv.
    ws_ref       : (4, Cout_p, Cin_p) bf16 side-tap weights: [2b+0]=prev tap, [2b+1]=next tap
    shift_ref    : (2, Cout_p, 1)     f32 folded BN shift
    *_out_ref    : (1, Cout_p, tile_l) f32 lane-dense output tiles
    """
    j = pl.program_id(1)
    base = pl.multiple_of(j * tile_l, 128)       # aligned start of this tile's halo window
    win = tile_l + 128                           # lane-aligned window width (covers +2 halo)

    def branch(x_ref, b, out_ref):
        # Aligned dynamic window load; the three taps are cheap static lane shifts of it.
        x_win = x_ref[0, :, pl.ds(base, win)]                # (Cin_p, tile_l+128) bf16
        x_prev = x_win[:, 0:tile_l]                          # x[l-1]
        x_cent = x_win[:, 1:tile_l + 1]                      # x[l]
        x_next = x_win[:, 2:tile_l + 2]                      # x[l+1]

        # Per-tap MXU matmuls, f32 accumulation.  The 1x1 skip conv (if any) is fused as
        # extra M rows of the center-tap matmul (contracts over Cin only).
        y_c = jnp.dot(wc_ref[b], x_cent, preferred_element_type=jnp.float32)        # (Cc1, T)
        y_p = jnp.dot(ws_ref[2 * b + 0], x_prev, preferred_element_type=jnp.float32)
        y_n = jnp.dot(ws_ref[2 * b + 1], x_next, preferred_element_type=jnp.float32)

        conv = jnp.maximum(y_c[:c_out_p] + y_p + y_n + shift_ref[b], 0.0)  # BN shift + ReLU
        # Dropout == identity (eval mode).
        if has_skip:
            res = y_c[c_out_p:]                               # fused 1x1 skip conv rows
        else:
            res = x_cent.astype(jnp.float32)                  # identity skip (Cin_p == Cout_p)
        out_ref[0] = (conv + res).astype(out_ref.dtype)

    branch(g_ref, 0, g_out_ref)
    branch(r_ref, 1, r_out_ref)


def _resblock_pallas(g_pad, r_pad, w_center, w_side, shift2, *,
                     c_out_p, tile_l, n_tiles, has_skip, vmem_limit):
    N, c_in_p, l_in = g_pad.shape
    l_p = n_tiles * tile_l
    kernel = functools.partial(_resblock_kernel, c_out_p=c_out_p, tile_l=tile_l,
                               has_skip=has_skip)
    out_sds = jax.ShapeDtypeStruct((N, c_out_p, l_p), jnp.float32)
    return pl.pallas_call(
        kernel,
        out_shape=(out_sds, out_sds),
        grid=(N, n_tiles),
        in_specs=[
            # Inputs: full padded (Cin_p, Lin) block, resident across the L-tile axis.
            pl.BlockSpec((1, c_in_p, l_in), lambda n, j: (n, 0, 0)),
            pl.BlockSpec((1, c_in_p, l_in), lambda n, j: (n, 0, 0)),
            # Grid-invariant folded weights / shift.
            pl.BlockSpec(w_center.shape, lambda n, j: (0, 0, 0)),
            pl.BlockSpec(w_side.shape, lambda n, j: (0, 0, 0)),
            pl.BlockSpec(shift2.shape, lambda n, j: (0, 0, 0)),
        ],
        out_specs=(
            pl.BlockSpec((1, c_out_p, tile_l), lambda n, j: (n, 0, j)),
            pl.BlockSpec((1, c_out_p, tile_l), lambda n, j: (n, 0, j)),
        ),
        compiler_params=pltpu.CompilerParams(
            dimension_semantics=("parallel", "parallel"),
            vmem_limit_bytes=vmem_limit,
        ),
    )(g_pad, r_pad, w_center, w_side, shift2)


class ResBlockPallas:
    """JAX/Pallas equivalent of the PyTorch ResBlock (inference semantics)."""

    MATMUL_DTYPE = jnp.bfloat16
    SUBLANE = 16  # bf16 sublane packing

    def __init__(self, input_size, output_size, dropout=0.2, dilation=1, key=None):
        assert dilation == 1, "only dilation=1 supported here"
        if key is None:
            key = jax.random.PRNGKey(0)
        k1, k2, k3, k4 = jax.random.split(key, 4)

        def xavier_uniform(k, shape):  # shape = (out, in, ksize)
            fan_in = shape[1] * shape[2]
            fan_out = shape[0] * shape[2]
            bound = (6.0 / (fan_in + fan_out)) ** 0.5
            return jax.random.uniform(k, shape, jnp.float32, -bound, bound)

        # Conv weights, PyTorch layout (C_out, C_in, K)
        self.e_conv_w = xavier_uniform(k1, (output_size, input_size, 3))
        self.g_conv_w = xavier_uniform(k2, (output_size, input_size, 3))

        self.has_skip = input_size != output_size
        if self.has_skip:
            bound = (1.0 / input_size) ** 0.5  # PyTorch default conv init range
            self.e_skip_w = jax.random.uniform(k3, (output_size, input_size, 1),
                                               jnp.float32, -bound, bound)
            self.g_skip_w = jax.random.uniform(k4, (output_size, input_size, 1),
                                               jnp.float32, -bound, bound)
        else:
            self.e_skip_w = None
            self.g_skip_w = None

        # BatchNorm params (fresh init, inference mode), folded to scale/shift.
        eps = 1e-5
        gamma = jnp.ones((output_size,), jnp.float32)
        beta = jnp.zeros((output_size,), jnp.float32)
        running_mean = jnp.zeros((output_size,), jnp.float32)
        running_var = jnp.ones((output_size,), jnp.float32)
        bn_scale = gamma / jnp.sqrt(running_var + eps)        # (Cout,)
        bn_shift = beta - running_mean * bn_scale              # (Cout,)
        self.bn_scale = bn_scale
        self.bn_shift = bn_shift

        self.c_in = input_size
        self.c_out = output_size
        self.c_in_p = _round_up(input_size, self.SUBLANE)
        self.c_out_p = _round_up(output_size, self.SUBLANE)

        # ---- fold BN scale + pad channels + split per conv tap, ONCE ----
        def fold(conv_w, skip_w):
            w = conv_w * bn_scale[:, None, None]                         # (Cout, Cin, 3)
            wp = jnp.zeros((self.c_out_p, self.c_in_p, 3), jnp.float32)
            wp = wp.at[:output_size, :input_size, :].set(w)
            w_prev, w_cent, w_next = wp[:, :, 0], wp[:, :, 1], wp[:, :, 2]
            if skip_w is not None:
                sk = jnp.zeros((self.c_out_p, self.c_in_p), jnp.float32)
                sk = sk.at[:output_size, :input_size].set(skip_w[:, :, 0])
                w_cent = jnp.concatenate([w_cent, sk], axis=0)           # (2*Cout_p, Cin_p)
            return w_cent, w_prev, w_next

        ec, ep, en = fold(self.e_conv_w, self.e_skip_w)
        gc, gp_, gn = fold(self.g_conv_w, self.g_skip_w)
        self.w_center = jnp.stack([ec, gc], axis=0).astype(self.MATMUL_DTYPE)        # (2,Cc1,Cin_p)
        self.w_side = jnp.stack([ep, en, gp_, gn], axis=0).astype(self.MATMUL_DTYPE)  # (4,Cout_p,Cin_p)
        shift_p = jnp.zeros((self.c_out_p,), jnp.float32).at[:output_size].set(bn_shift)
        self.shift2 = jnp.stack([shift_p, shift_p], axis=0).reshape(2, self.c_out_p, 1)

    def _vmem_limit_bytes(self, tile_l, l_in):
        bpe = 2  # bf16
        cc1 = self.w_center.shape[1]
        in_b = 2 * 2 * self.c_in_p * l_in * bpe                       # 2 inputs, 2 buffers
        out_b = 2 * 2 * self.c_out_p * tile_l * 4                     # 2 outputs, 2 buffers
        w_b = 2 * (self.w_center.size + self.w_side.size) * bpe + 2 * self.shift2.size * 4
        tmp_b = 2 * (4 * self.c_in_p * (tile_l + 128) * 4 + (cc1 + 3 * self.c_out_p) * tile_l * 4)
        need = int(1.5 * (in_b + out_b + w_b + tmp_b)) + (2 << 20)
        # Keep within v7x's 64 MiB physical VMEM; floor at the v6e default scoped limit.
        return max(32 << 20, min(need, 64 << 20))

    def __call__(self, g_ncl, r_ncl):
        # g_ncl, r_ncl: (N, C_in, L) PyTorch NCL layout
        assert g_ncl.shape == r_ncl.shape
        N, c_in, L = g_ncl.shape
        assert c_in == self.c_in

        l_p = _round_up(L, 128)
        tile_l = next(t for t in (512, 384, 256, 128) if l_p % t == 0)
        n_tiles = l_p // tile_l
        l_in = l_p + 128                       # 1 left halo col + >=127 right pad (aligned window)

        def prep(x):
            xb = x.astype(self.MATMUL_DTYPE)
            return jnp.pad(xb, ((0, 0), (0, self.c_in_p - c_in), (1, l_in - 1 - L)))

        g_pad = prep(g_ncl)
        r_pad = prep(r_ncl)

        g_out, r_out = _resblock_pallas(
            g_pad, r_pad, self.w_center, self.w_side, self.shift2,
            c_out_p=self.c_out_p, tile_l=tile_l, n_tiles=n_tiles,
            has_skip=self.has_skip,
            vmem_limit=self._vmem_limit_bytes(tile_l, l_in))
        return g_out[:, :self.c_out, :L], r_out[:, :self.c_out, :L]


# ---------- pure-JAX reference (mirrors the kernel's bf16 quantization) ----------
def _ref_branch(x_ncl, conv_w, skip_w, scale, shift, compute_dtype=jnp.bfloat16):
    N, C, L = x_ncl.shape
    xb = x_ncl.astype(compute_dtype).astype(jnp.float32)
    w = (conv_w * scale[:, None, None]).astype(compute_dtype).astype(jnp.float32)
    xpad = jnp.pad(xb, ((0, 0), (0, 0), (1, 1)))
    out = sum(jnp.einsum('ncl,oc->nol', xpad[:, :, k:k + L], w[:, :, k]) for k in range(3))
    y = jnp.maximum(out + shift.reshape(1, -1, 1), 0.0)
    if skip_w is not None:
        wsk = skip_w[:, :, 0].astype(compute_dtype).astype(jnp.float32)
        res = jnp.einsum('ncl,oc->nol', xb, wsk)
    else:
        res = xb
    return y + res


if __name__ == "__main__":
    key = jax.random.PRNGKey(0)
    k_g, k_r, k_p, k_g2, k_r2, k_p2, k_g3, k_r3, k_p3 = jax.random.split(key, 9)
    TOL = dict(atol=1e-3, rtol=1e-3)

    # Case 1: Cin != Cout -> 1x1 skip conv fused into the center-tap matmul.
    N, C_IN, C_OUT, L = 2, 4, 8, 16
    g = jax.random.normal(k_g, (N, C_IN, L), jnp.float32)
    r = jax.random.normal(k_r, (N, C_IN, L), jnp.float32)
    block = ResBlockPallas(C_IN, C_OUT, dropout=0.2, dilation=1, key=k_p)
    g_out, r_out = block(g, r)
    g_out = jax.block_until_ready(g_out); r_out = jax.block_until_ready(r_out)
    g_ref = _ref_branch(g, block.e_conv_w, block.e_skip_w, block.bn_scale, block.bn_shift)
    r_ref = _ref_branch(r, block.g_conv_w, block.g_skip_w, block.bn_scale, block.bn_shift)
    assert g_out.shape == (N, C_OUT, L) and r_out.shape == (N, C_OUT, L)
    assert jnp.allclose(g_out, g_ref, **TOL)
    assert jnp.allclose(r_out, r_ref, **TOL)

    # Case 2: Cin == Cout -> identity skip path (no skip matmul rows).
    C2 = 8
    g2 = jax.random.normal(k_g2, (N, C2, L), jnp.float32)
    r2 = jax.random.normal(k_r2, (N, C2, L), jnp.float32)
    block2 = ResBlockPallas(C2, C2, dropout=0.2, dilation=1, key=k_p2)
    g2_out, r2_out = block2(g2, r2)
    g2_out = jax.block_until_ready(g2_out); r2_out = jax.block_until_ready(r2_out)
    g2_ref = _ref_branch(g2, block2.e_conv_w, None, block2.bn_scale, block2.bn_shift)
    r2_ref = _ref_branch(r2, block2.g_conv_w, None, block2.bn_scale, block2.bn_shift)
    assert g2_out.shape == (N, C2, L) and r2_out.shape == (N, C2, L)
    assert jnp.allclose(g2_out, g2_ref, **TOL)
    assert jnp.allclose(r2_out, r2_ref, **TOL)

    # Case 3: non-multiple-of-128 L exercising multiple L tiles + halo across tile edges.
    N3, C_IN3, C_OUT3, L3 = 2, 8, 16, 600   # -> Lp=640, tile_l=128, 5 L-tiles
    g3 = jax.random.normal(k_g3, (N3, C_IN3, L3), jnp.float32)
    r3 = jax.random.normal(k_r3, (N3, C_IN3, L3), jnp.float32)
    block3 = ResBlockPallas(C_IN3, C_OUT3, dropout=0.2, dilation=1, key=k_p3)
    g3_out, r3_out = block3(g3, r3)
    g3_out = jax.block_until_ready(g3_out); r3_out = jax.block_until_ready(r3_out)
    g3_ref = _ref_branch(g3, block3.e_conv_w, block3.e_skip_w, block3.bn_scale, block3.bn_shift)
    r3_ref = _ref_branch(r3, block3.g_conv_w, block3.g_skip_w, block3.bn_scale, block3.bn_shift)
    assert g3_out.shape == (N3, C_OUT3, L3) and r3_out.shape == (N3, C_OUT3, L3)
    assert jnp.allclose(g3_out, g3_ref, **TOL)
    assert jnp.allclose(r3_out, r3_ref, **TOL)

    print("KERNEL_OK")
</pallas_src>

<mosaic_0001>
module attributes {stable_mosaic.version = 11 : i64} {
  func.func @_resblock_kernel(%arg0: i32, %arg1: i32, %arg2: memref<1x16x256xbf16, #tpu.memory_space<vmem>>, %arg3: memref<1x16x256xbf16, #tpu.memory_space<vmem>>, %arg4: memref<2x32x16xbf16, #tpu.memory_space<vmem>>, %arg5: memref<4x16x16xbf16, #tpu.memory_space<vmem>>, %arg6: memref<2x16x1xf32, #tpu.memory_space<vmem>>, %arg7: memref<1x16x128xf32, #tpu.memory_space<vmem>>, %arg8: memref<1x16x128xf32, #tpu.memory_space<vmem>>) attributes {dimension_semantics = [#tpu.dimension_semantics<parallel>, #tpu.dimension_semantics<parallel>], iteration_bounds = array<i64: 2, 1>, scalar_prefetch = 0 : i64, scratch_operands = 0 : i64, tpu.core_type = #tpu.core_type<tc>, window_params = [{transform_indices = @transform_0, window_bounds = array<i64: 1, 16, 256>}, {transform_indices = @transform_1, window_bounds = array<i64: 1, 16, 256>}, {pipeline_mode = #tpu.pipeline_mode<synchronous>, transform_indices = @transform_2, window_bounds = array<i64: 2, 32, 16>}, {pipeline_mode = #tpu.pipeline_mode<synchronous>, transform_indices = @transform_3, window_bounds = array<i64: 4, 16, 16>}, {pipeline_mode = #tpu.pipeline_mode<synchronous>, transform_indices = @transform_4, window_bounds = array<i64: 2, 16, 1>}, {transform_indices = @transform_5, window_bounds = array<i64: 1, 16, 128>}, {transform_indices = @transform_6, window_bounds = array<i64: 1, 16, 128>}]} {
    %c128_i32 = arith.constant 128 : i32
    %0 = arith.muli %arg1, %c128_i32 : i32
    %1 = tpu.assume_multiple %0, 128 : i32
    %c0 = arith.constant 0 : index
    %c0_0 = arith.constant 0 : index
    %2 = arith.index_cast %1 : i32 to index
    %3 = vector.load %arg2[%c0, %c0_0, %2] : memref<1x16x256xbf16, #tpu.memory_space<vmem>>, vector<1x16x256xbf16>
    %4 = vector.shape_cast %3 : vector<1x16x256xbf16> to vector<16x256xbf16>
    %5 = vector.extract_strided_slice %4 {offsets = [0, 0], sizes = [16, 128], strides = [1, 1]} : vector<16x256xbf16> to vector<16x128xbf16>
    %6 = vector.extract_strided_slice %4 {offsets = [0, 1], sizes = [16, 128], strides = [1, 1]} : vector<16x256xbf16> to vector<16x128xbf16>
    %7 = vector.extract_strided_slice %4 {offsets = [0, 2], sizes = [16, 128], strides = [1, 1]} : vector<16x256xbf16> to vector<16x128xbf16>
    %c0_1 = arith.constant 0 : index
    %c0_2 = arith.constant 0 : index
    %c0_3 = arith.constant 0 : index
    %8 = vector.load %arg4[%c0_1, %c0_2, %c0_3] : memref<2x32x16xbf16, #tpu.memory_space<vmem>>, vector<1x32x16xbf16>
    %9 = vector.shape_cast %8 : vector<1x32x16xbf16> to vector<32x16xbf16>
    %cst = arith.constant dense<0.000000e+00> : vector<32x128xf32>
    %10 = tpu.matmul %9, %6, %cst {dimension_numbers = #tpu.dot_dimension_numbers<[1], [0], [0], [1], [0, 0, 1, 1], [], []>} : vector<32x16xbf16>, vector<16x128xbf16>, vector<32x128xf32> -> vector<32x128xf32>
    %c0_4 = arith.constant 0 : index
    %c0_5 = arith.constant 0 : index
    %c0_6 = arith.constant 0 : index
    %11 = vector.load %arg5[%c0_4, %c0_5, %c0_6] : memref<4x16x16xbf16, #tpu.memory_space<vmem>>, vector<1x16x16xbf16>
    %12 = vector.shape_cast %11 : vector<1x16x16xbf16> to vector<16x16xbf16>
    %cst_7 = arith.constant dense<0.000000e+00> : vector<16x128xf32>
    %13 = tpu.matmul %12, %5, %cst_7 {dimension_numbers = #tpu.dot_dimension_numbers<[1], [0], [0], [1], [0, 0, 1, 1], [], []>} : vector<16x16xbf16>, vector<16x128xbf16>, vector<16x128xf32> -> vector<16x128xf32>
    %c1 = arith.constant 1 : index
    %c0_8 = arith.constant 0 : index
    %c0_9 = arith.constant 0 : index
    %14 = vector.load %arg5[%c1, %c0_8, %c0_9] : memref<4x16x16xbf16, #tpu.memory_space<vmem>>, vector<1x16x16xbf16>
    %15 = vector.shape_cast %14 : vector<1x16x16xbf16> to vector<16x16xbf16>
    %cst_10 = arith.constant dense<0.000000e+00> : vector<16x128xf32>
    %16 = tpu.matmul %15, %7, %cst_10 {dimension_numbers = #tpu.dot_dimension_numbers<[1], [0], [0], [1], [0, 0, 1, 1], [], []>} : vector<16x16xbf16>, vector<16x128xbf16>, vector<16x128xf32> -> vector<16x128xf32>
    %17 = vector.extract_strided_slice %10 {offsets = [0, 0], sizes = [16, 128], strides = [1, 1]} : vector<32x128xf32> to vector<16x128xf32>
    %18 = arith.addf %17, %13 : vector<16x128xf32>
    %19 = arith.addf %18, %16 : vector<16x128xf32>
    %c0_11 = arith.constant 0 : index
    %c0_12 = arith.constant 0 : index
    %c0_13 = arith.constant 0 : index
    %20 = vector.load %arg6[%c0_11, %c0_12, %c0_13] : memref<2x16x1xf32, #tpu.memory_space<vmem>>, vector<1x16x1xf32>
    %21 = vector.shape_cast %20 : vector<1x16x1xf32> to vector<16x1xf32>
    %22 = vector.broadcast %21 : vector<16x1xf32> to vector<16x128xf32>
    %23 = arith.addf %19, %22 : vector<16x128xf32>
    %cst_14 = arith.constant 0.000000e+00 : f32
    %24 = vector.broadcast %cst_14 : f32 to vector<16x128xf32>
    %25 = arith.maximumf %23, %24 : vector<16x128xf32>
    %26 = vector.extract_strided_slice %10 {offsets = [16, 0], sizes = [16, 128], strides = [1, 1]} : vector<32x128xf32> to vector<16x128xf32>
    %27 = arith.addf %25, %26 : vector<16x128xf32>
    %c0_15 = arith.constant 0 : index
    %c0_16 = arith.constant 0 : index
    %c0_17 = arith.constant 0 : index
    %28 = vector.load %arg7[%c0_15, %c0_16, %c0_17] : memref<1x16x128xf32, #tpu.memory_space<vmem>>, vector<1x16x128xf32>
    %29 = vector.shape_cast %28 : vector<1x16x128xf32> to vector<16x128xf32>
    %30 = vector.shape_cast %27 : vector<16x128xf32> to vector<1x16x128xf32>
    tpu.vector_store %arg7[%c0_15, %c0_16, %c0_17], %30 {strides = array<i32>} : memref<1x16x128xf32, #tpu.memory_space<vmem>>, vector<1x16x128xf32>,
    %c0_18 = arith.constant 0 : index
    %c0_19 = arith.constant 0 : index
    %31 = arith.index_cast %1 : i32 to index
    %32 = vector.load %arg3[%c0_18, %c0_19, %31] : memref<1x16x256xbf16, #tpu.memory_space<vmem>>, vector<1x16x256xbf16>
    %33 = vector.shape_cast %32 : vector<1x16x256xbf16> to vector<16x256xbf16>
    %34 = vector.extract_strided_slice %33 {offsets = [0, 0], sizes = [16, 128], strides = [1, 1]} : vector<16x256xbf16> to vector<16x128xbf16>
    %35 = vector.extract_strided_slice %33 {offsets = [0, 1], sizes = [16, 128], strides = [1, 1]} : vector<16x256xbf16> to vector<16x128xbf16>
    %36 = vector.extract_strided_slice %33 {offsets = [0, 2], sizes = [16, 128], strides = [1, 1]} : vector<16x256xbf16> to vector<16x128xbf16>
    %c1_20 = arith.constant 1 : index
    %c0_21 = arith.constant 0 : index
    %c0_22 = arith.constant 0 : index
    %37 = vector.load %arg4[%c1_20, %c0_21, %c0_22] : memref<2x32x16xbf16, #tpu.memory_space<vmem>>, vector<1x32x16xbf16>
    %38 = vector.shape_cast %37 : vector<1x32x16xbf16> to vector<32x16xbf16>
    %cst_23 = arith.constant dense<0.000000e+00> : vector<32x128xf32>
    %39 = tpu.matmul %38, %35, %cst_23 {dimension_numbers = #tpu.dot_dimension_numbers<[1], [0], [0], [1], [0, 0, 1, 1], [], []>} : vector<32x16xbf16>, vector<16x128xbf16>, vector<32x128xf32> -> vector<32x128xf32>
    %c2 = arith.constant 2 : index
    %c0_24 = arith.constant 0 : index
    %c0_25 = arith.constant 0 : index
    %40 = vector.load %arg5[%c2, %c0_24, %c0_25] : memref<4x16x16xbf16, #tpu.memory_space<vmem>>, vector<1x16x16xbf16>
    %41 = vector.shape_cast %40 : vector<1x16x16xbf16> to vector<16x16xbf16>
    %cst_26 = arith.constant dense<0.000000e+00> : vector<16x128xf32>
    %42 = tpu.matmul %41, %34, %cst_26 {dimension_numbers = #tpu.dot_dimension_numbers<[1], [0], [0], [1], [0, 0, 1, 1], [], []>} : vector<16x16xbf16>, vector<16x128xbf16>, vector<16x128xf32> -> vector<16x128xf32>
    %c3 = arith.constant 3 : index
    %c0_27 = arith.constant 0 : index
    %c0_28 = arith.constant 0 : index
    %43 = vector.load %arg5[%c3, %c0_27, %c0_28] : memref<4x16x16xbf16, #tpu.memory_space<vmem>>, vector<1x16x16xbf16>
    %44 = vector.shape_cast %43 : vector<1x16x16xbf16> to vector<16x16xbf16>
    %cst_29 = arith.constant dense<0.000000e+00> : vector<16x128xf32>
    %45 = tpu.matmul %44, %36, %cst_29 {dimension_numbers = #tpu.dot_dimension_numbers<[1], [0], [0], [1], [0, 0, 1, 1], [], []>} : vector<16x16xbf16>, vector<16x128xbf16>, vector<16x128xf32> -> vector<16x128xf32>
    %46 = vector.extract_strided_slice %39 {offsets = [0, 0], sizes = [16, 128], strides = [1, 1]} : vector<32x128xf32> to vector<16x128xf32>
    %47 = arith.addf %46, %42 : vector<16x128xf32>
    %48 = arith.addf %47, %45 : vector<16x128xf32>
    %c1_30 = arith.constant 1 : index
    %c0_31 = arith.constant 0 : index
    %c0_32 = arith.constant 0 : index
    %49 = vector.load %arg6[%c1_30, %c0_31, %c0_32] : memref<2x16x1xf32, #tpu.memory_space<vmem>>, vector<1x16x1xf32>
    %50 = vector.shape_cast %49 : vector<1x16x1xf32> to vector<16x1xf32>
    %51 = vector.broadcast %50 : vector<16x1xf32> to vector<16x128xf32>
    %52 = arith.addf %48, %51 : vector<16x128xf32>
    %cst_33 = arith.constant 0.000000e+00 : f32
    %53 = vector.broadcast %cst_33 : f32 to vector<16x128xf32>
    %54 = arith.maximumf %52, %53 : vector<16x128xf32>
    %55 = vector.extract_strided_slice %39 {offsets = [16, 0], sizes = [16, 128], strides = [1, 1]} : vector<32x128xf32> to vector<16x128xf32>
    %56 = arith.addf %54, %55 : vector<16x128xf32>
    %c0_34 = arith.constant 0 : index
    %c0_35 = arith.constant 0 : index
    %c0_36 = arith.constant 0 : index
    %57 = vector.load %arg8[%c0_34, %c0_35, %c0_36] : memref<1x16x128xf32, #tpu.memory_space<vmem>>, vector<1x16x128xf32>
    %58 = vector.shape_cast %57 : vector<1x16x128xf32> to vector<16x128xf32>
    %59 = vector.shape_cast %56 : vector<16x128xf32> to vector<1x16x128xf32>
    tpu.vector_store %arg8[%c0_34, %c0_35, %c0_36], %59 {strides = array<i32>} : memref<1x16x128xf32, #tpu.memory_space<vmem>>, vector<1x16x128xf32>,
    return
  }
  func.func @transform_0(%arg0: i32, %arg1: i32) -> (i32, i32, i32) {
    %c0_i32 = arith.constant 0 : i32
    %c0_i32_0 = arith.constant 0 : i32
    %c0_i32_1 = arith.constant 0 : i32
    return %arg0, %c0_i32, %c0_i32_0 : i32, i32, i32
  }
  func.func @transform_1(%arg0: i32, %arg1: i32) -> (i32, i32, i32) {
    %c0_i32 = arith.constant 0 : i32
    %c0_i32_0 = arith.constant 0 : i32
    %c0_i32_1 = arith.constant 0 : i32
    return %arg0, %c0_i32, %c0_i32_0 : i32, i32, i32
  }
  func.func @transform_2(%arg0: i32, %arg1: i32) -> (i32, i32, i32) {
    %c0_i32 = arith.constant 0 : i32
    %c0_i32_0 = arith.constant 0 : i32
    %c0_i32_1 = arith.constant 0 : i32
    %c0_i32_2 = arith.constant 0 : i32
    return %c0_i32, %c0_i32_0, %c0_i32_1 : i32, i32, i32
  }
  func.func @transform_3(%arg0: i32, %arg1: i32) -> (i32, i32, i32) {
    %c0_i32 = arith.constant 0 : i32
    %c0_i32_0 = arith.constant 0 : i32
    %c0_i32_1 = arith.constant 0 : i32
    %c0_i32_2 = arith.constant 0 : i32
    return %c0_i32, %c0_i32_0, %c0_i32_1 : i32, i32, i32
  }
  func.func @transform_4(%arg0: i32, %arg1: i32) -> (i32, i32, i32) {
    %c0_i32 = arith.constant 0 : i32
    %c0_i32_0 = arith.constant 0 : i32
    %c0_i32_1 = arith.constant 0 : i32
    %c0_i32_2 = arith.constant 0 : i32
    return %c0_i32, %c0_i32_0, %c0_i32_1 : i32, i32, i32
  }
  func.func @transform_5(%arg0: i32, %arg1: i32) -> (i32, i32, i32) {
    %c0_i32 = arith.constant 0 : i32
    %c0_i32_0 = arith.constant 0 : i32
    return %arg0, %c0_i32, %arg1 : i32, i32, i32
  }
  func.func @transform_6(%arg0: i32, %arg1: i32) -> (i32, i32, i32) {
    %c0_i32 = arith.constant 0 : i32
    %c0_i32_0 = arith.constant 0 : i32
    return %arg0, %c0_i32, %arg1 : i32, i32, i32
  }
}

</mosaic_0001>

<llo_original>
// kernel: tpu_custom_call.1
$region0: #{tpu_custom_call.1}
  #allocation0 [shape = 'u32[]', space=smem, size = 0x4, offset = 0x4, fixed_abs, tag = 'smem constant byte address 0x4 - core index']
  #allocation1 [shape = 'u32[144,128]{1,0:T(1,128)}', space=vmem, size = 0x12000, scoped, tag = 'internal scratch']
  %s0 = inlined_call_operand.vmem [shape: bf16[2,16,256], index: 0, kind: input, shape index: {}]
  %s1 = inlined_call_operand.vmem [shape: bf16[2,16,256], index: 1, kind: input, shape index: {}]
  %s2 = inlined_call_operand.vmem [shape: bf16[2,32,16], index: 2, kind: input, shape index: {}]
  %s3 = inlined_call_operand.hbm [shape: bf16[4,16,16], index: 3, kind: input, shape index: {}]
  %s4 = inlined_call_operand.vmem [shape: f32[2,16,1], index: 4, kind: input, shape index: {}]
  %s5 = inlined_call_operand.hbm [shape: f32[2,16,128], index: 5, kind: output, shape index: {0}]
  %s6 = inlined_call_operand.hbm [shape: f32[2,16,128], index: 6, kind: output, shape index: {1}]
  %7 = xla_tuple %s5, %s6
  %s8 = sld [smem:[#allocation0]]
  $region65: #{tpu_custom_call.1} parent=0
    _
  %s10 = ssub.s32 1, %s8
  %s11 = scalar_select 0, %s10, %s8
  $region1: #{tpu_custom_call.1} parent=0
    #allocation2 [shape = 'u8[16384]{0}', space=vmem, size = 0x4000, scoped, tag = 'input window, operand 3, single buffered']
    #allocation3 [shape = 's32[2]{0}', space=sflag, size = 0x8, scoped, tag = 'scoped memory for tpu_custom_call.1']
    #allocation4 [shape = 's32[2]{0}', space=sflag, size = 0x8, scoped, tag = 'scoped memory for tpu_custom_call.1']
    #allocation5 [shape = 'u8[16384]{0}', space=vmem, size = 0x4000, scoped, tag = 'output window, operand 0']
    #allocation6 [shape = 'u8[16384]{0}', space=vmem, size = 0x4000, scoped, tag = 'output window, operand 1']
    #allocation7 [shape = 's32[2]{0}', space=sflag, size = 0x8, scoped, tag = 'scoped memory for tpu_custom_call.1']
    %12 = vsyncpa [#allocation3], 0
    %13 = vsyncpa [#allocation4], 0
    %s14 = scalar_lea.sflag [#allocation4], 1
    %15 = vsyncpa %s14, 0
    %16 = vsyncpa [#allocation7], 0
    %s17 = scalar_lea.sflag [#allocation7], 1
    %18 = vsyncpa %s17, 0
    loop: start=0, step=1, limit=4
    $region2: #{tpu_custom_call.1} parent=1 // loop_pre_header
      _
    $region3: #{tpu_custom_call.1} parent=1 // loop_header
      %s20 = sphi 0, %s24
      %p21 = scmp.ge.s32.totalorder %s20, 4
      %s27 = sphi 0, %s39
      %s28 = sphi 0, %s35
      %s29 = sphi 0, %s27
      %s30 = sphi 0, %s28
      %s31 = sphi 0, %s29
      %s32 = sphi 0, %s30
      %s42 = sphi 0, %s44
      %s45 = sphi 0, %s42
      %s46 = sphi 0, %s45
      %s62 = sphi 0, %s46
      %s68 = sphi 0, %s70
      %s71 = sphi 0, %s68
      %s72 = sphi 0, %s71
      %s88 = sphi 0, %s72
      %s92 = sphi 0, %s92
      %s94 = sphi 0, %s92
      %s95 = sphi 0, %s94
      %s109 = sphi 0, %s95
      %s113 = sphi 0, %s113
      %s115 = sphi 0, %s113
      %s116 = sphi 0, %s115
      %s130 = sphi 0, %s116
      %s134 = sphi 0, %s134
      %s136 = sphi 0, %s134
      %s137 = sphi 0, %s136
      %s151 = sphi 0, %s137
      %s159 = sphi 0, %s161
      %s162 = sphi 0, %s159
      %s163 = sphi 0, %s162
      %s179 = sphi 0, %s163
      %s187 = sphi 0, %s189
      %s190 = sphi 0, %s187
      %s191 = sphi 0, %s190
      %s207 = sphi 0, %s191
    $region4: #{tpu_custom_call.1} parent=1 // loop_header_branch
      %23 = sbr.rel (%p21) target = $region8
    $region5: #{tpu_custom_call.1} parent=1 // loop_body
      %s25 = ssub.s32 %s20, 1
      %s26 = ssub.s32 %s20, 2
      %s33 = sadd.s32 1, %s28
      %p34 = scmp.ge.s32.totalorder %s33, 1
      %s35 = scalar_select %p34, 0, %s33
      %s36 = sadd.s32 1, %s27
      %s37 = scalar_select %p34, %s36, %s27
      %p38 = scmp.ge.s32.totalorder %s37, 2
      %s39 = scalar_select %p38, 0, %s37
      %s40 = ssub.s32 %s27, %s39
      %p41 = scmp.eq.s32.totalorder %s40, 0
      %s43 = sadd.s32 %s42, 1
      %s44 = scalar_select %p41, %s42, %s43
      %p47 = pneg %p41
      %p48 = scmp.eq.s32.totalorder %s20, 1
      %p49 = por %p47, %p48
      %p50 = scmp.ne.s32.totalorder %s42, %s45
      %p51 = scmp.eq.s32.totalorder %s20, 0
      %p52 = por %p50, %p51
      %p53 = scmp.ne.s32.totalorder %s42, %s45
      %p54 = scmp.eq.s32.totalorder %s25, 1
      %p55 = por %p53, %p54
      %p56 = scmp.ne.s32.totalorder %s45, %s46
      %p57 = scmp.eq.s32.totalorder %s25, 0
      %p58 = por %p56, %p57
      %p59 = scmp.ne.s32.totalorder %s45, %s46
      %p60 = scmp.eq.s32.totalorder %s26, 1
      %p61 = por %p59, %p60
      %p63 = scmp.ne.s32.totalorder %s46, %s62
      %p64 = scmp.eq.s32.totalorder %s26, 0
      %p65 = por %p63, %p64
      %s66 = ssub.s32 %s27, %s39
      %p67 = scmp.eq.s32.totalorder %s66, 0
      %s69 = sadd.s32 %s68, 1
      %s70 = scalar_select %p67, %s68, %s69
      %p73 = pneg %p67
      %p74 = scmp.eq.s32.totalorder %s20, 1
      %p75 = por %p73, %p74
      %p76 = scmp.ne.s32.totalorder %s68, %s71
      %p77 = scmp.eq.s32.totalorder %s20, 0
      %p78 = por %p76, %p77
      %p79 = scmp.ne.s32.totalorder %s68, %s71
      %p80 = scmp.eq.s32.totalorder %s25, 1
      %p81 = por %p79, %p80
      %p82 = scmp.ne.s32.totalorder %s71, %s72
      %p83 = scmp.eq.s32.totalorder %s25, 0
      %p84 = por %p82, %p83
      %p85 = scmp.ne.s32.totalorder %s71, %s72
      %p86 = scmp.eq.s32.totalorder %s26, 1
      %p87 = por %p85, %p86
      %p89 = scmp.ne.s32.totalorder %s72, %s88
      %p90 = scmp.eq.s32.totalorder %s26, 0
      %p91 = por %p89, %p90
      %s93 = sadd.s32 %s92, 1
      %p96 = scmp.eq.s32.totalorder %s20, 1
      %p97 = scmp.ne.s32.totalorder %s92, %s94
      %p98 = scmp.eq.s32.totalorder %s20, 0
      %p99 = por %p97, %p98
      %p100 = scmp.ne.s32.totalorder %s92, %s94
      %p101 = scmp.eq.s32.totalorder %s25, 1
      %p102 = por %p100, %p101
      %p103 = scmp.ne.s32.totalorder %s94, %s95
      %p104 = scmp.eq.s32.totalorder %s25, 0
      %p105 = por %p103, %p104
      %p106 = scmp.ne.s32.totalorder %s94, %s95
      %p107 = scmp.eq.s32.totalorder %s26, 1
      %p108 = por %p106, %p107
      %p110 = scmp.ne.s32.totalorder %s95, %s109
      %p111 = scmp.eq.s32.totalorder %s26, 0
      %p112 = por %p110, %p111
      %s114 = sadd.s32 %s113, 1
      %p117 = scmp.eq.s32.totalorder %s20, 1
      %p118 = scmp.ne.s32.totalorder %s113, %s115
      %p119 = scmp.eq.s32.totalorder %s20, 0
      %p120 = por %p118, %p119
      %p121 = scmp.ne.s32.totalorder %s113, %s115
      %p122 = scmp.eq.s32.totalorder %s25, 1
      %p123 = por %p121, %p122
      %p124 = scmp.ne.s32.totalorder %s115, %s116
      %p125 = scmp.eq.s32.totalorder %s25, 0
      %p126 = por %p124, %p125
      %p127 = scmp.ne.s32.totalorder %s115, %s116
      %p128 = scmp.eq.s32.totalorder %s26, 1
      %p129 = por %p127, %p128
      %p131 = scmp.ne.s32.totalorder %s116, %s130
      %p132 = scmp.eq.s32.totalorder %s26, 0
      %p133 = por %p131, %p132
      %s135 = sadd.s32 %s134, 1
      %p138 = scmp.eq.s32.totalorder %s20, 1
      %p139 = scmp.ne.s32.totalorder %s134, %s136
      %p140 = scmp.eq.s32.totalorder %s20, 0
      %p141 = por %p139, %p140
      %p142 = scmp.ne.s32.totalorder %s134, %s136
      %p143 = scmp.eq.s32.totalorder %s25, 1
      %p144 = por %p142, %p143
      %p145 = scmp.ne.s32.totalorder %s136, %s137
      %p146 = scmp.eq.s32.totalorder %s25, 0
      %p147 = por %p145, %p146
      %p148 = scmp.ne.s32.totalorder %s136, %s137
      %p149 = scmp.eq.s32.totalorder %s26, 1
      %p150 = por %p148, %p149
      %p152 = scmp.ne.s32.totalorder %s137, %s151
      %p153 = scmp.eq.s32.totalorder %s26, 0
      %p154 = por %p152, %p153
      %s155 = ssub.s32 %s27, %s39
      %s156 = ssub.s32 %s28, %s35
      %s157 = sor.u32 %s155, %s156
      %p158 = scmp.eq.s32.totalorder %s157, 0
      %s160 = sadd.s32 %s159, 1
      %s161 = scalar_select %p158, %s159, %s160
      %p164 = pneg %p158
      %p165 = scmp.eq.s32.totalorder %s20, 1
      %p166 = por %p164, %p165
      %p167 = scmp.ne.s32.totalorder %s159, %s162
      %p168 = scmp.eq.s32.totalorder %s20, 0
      %p169 = por %p167, %p168
      %p170 = scmp.ne.s32.totalorder %s159, %s162
      %p171 = scmp.eq.s32.totalorder %s25, 1
      %p172 = por %p170, %p171
      %p173 = scmp.ne.s32.totalorder %s162, %s163
      %p174 = scmp.eq.s32.totalorder %s25, 0
      %p175 = por %p173, %p174
      %p176 = scmp.ne.s32.totalorder %s162, %s163
      %p177 = scmp.eq.s32.totalorder %s26, 1
      %p178 = por %p176, %p177
      %p180 = scmp.ne.s32.totalorder %s163, %s179
      %p181 = scmp.eq.s32.totalorder %s26, 0
      %p182 = por %p180, %p181
      %s183 = ssub.s32 %s27, %s39
      %s184 = ssub.s32 %s28, %s35
      %s185 = sor.u32 %s183, %s184
      %p186 = scmp.eq.s32.totalorder %s185, 0
      %s188 = sadd.s32 %s187, 1
      %s189 = scalar_select %p186, %s187, %s188
      %p192 = pneg %p186
      %p193 = scmp.eq.s32.totalorder %s20, 1
      %p194 = por %p192, %p193
      %p195 = scmp.ne.s32.totalorder %s187, %s190
      %p196 = scmp.eq.s32.totalorder %s20, 0
      %p197 = por %p195, %p196
      %p198 = scmp.ne.s32.totalorder %s187, %s190
      %p199 = scmp.eq.s32.totalorder %s25, 1
      %p200 = por %p198, %p199
      %p201 = scmp.ne.s32.totalorder %s190, %s191
      %p202 = scmp.eq.s32.totalorder %s25, 0
      %p203 = por %p201, %p202
      %p204 = scmp.ne.s32.totalorder %s190, %s191
      %p205 = scmp.eq.s32.totalorder %s26, 1
      %p206 = por %p204, %p205
      %p208 = scmp.ne.s32.totalorder %s191, %s207
      %p209 = scmp.eq.s32.totalorder %s26, 0
      %p210 = por %p208, %p209
      %p211 = scmp.le.s32.totalorder 1, %s20
      %p212 = scmp.lt.s32.totalorder %s20, 3
      %p213 = pnand %p211, %p212
      %p214 = pneg %p213
      // Predicated region
      $region9: #{tpu_custom_call.1} parent=5 // pred_check
        _
      $region10: #{tpu_custom_call.1} parent=5 // pred_check_branch
        %216 = sbr.rel (%p213) target = $region12
      $region11: #{tpu_custom_call.1} parent=5 // pred_region
        %s217 = ssub.s32 %s20, 1
        // Predicated region
        $region13: #{tpu_custom_call.1} parent=11 // pred_check
          %p218 = pneg %p105
        $region14: #{tpu_custom_call.1} parent=11 // pred_check_branch
          %220 = sbr.rel (%p218) target = $region16
        $region15: #{tpu_custom_call.1} parent=11 // pred_region
          _
        $region16: #{tpu_custom_call.1} parent=11 // pred_fallthru
          _
        // Predicated region
        $region17: #{tpu_custom_call.1} parent=11 // pred_check
          %p221 = pneg %p126
        $region18: #{tpu_custom_call.1} parent=11 // pred_check_branch
          %223 = sbr.rel (%p221) target = $region20
        $region19: #{tpu_custom_call.1} parent=11 // pred_region
          %s225 = ssub.s32 512, 512
          %226 = vsyncadd [#allocation3], %s225
          %s227 = sshll.u32 [#allocation2], 4
          %s228 = int_to_ptr.vmem [resolvable:$true] %s227
          %233 = dma.hbm_to_vmem [thread:$0]  %s3, 512, %s228, [#allocation3], 64, 64, 4
        $region20: #{tpu_custom_call.1} parent=11 // pred_fallthru
          _
        // Predicated region
        $region21: #{tpu_custom_call.1} parent=11 // pred_check
          %p234 = pneg %p147
        $region22: #{tpu_custom_call.1} parent=11 // pred_check_branch
          %236 = sbr.rel (%p234) target = $region24
        $region23: #{tpu_custom_call.1} parent=11 // pred_region
          _
        $region24: #{tpu_custom_call.1} parent=11 // pred_fallthru
          _
      $region12: #{tpu_custom_call.1} parent=5 // pred_fallthru
        _
      %p237 = scmp.lt.s32.totalorder %s20, 2
      // Predicated region
      $region25: #{tpu_custom_call.1} parent=5 // pred_check
        %p238 = pneg %p237
      $region26: #{tpu_custom_call.1} parent=5 // pred_check_branch
        %240 = sbr.rel (%p238) target = $region28
      $region27: #{tpu_custom_call.1} parent=5 // pred_region
        // Predicated region
        $region29: #{tpu_custom_call.1} parent=27 // pred_check
          %p241 = pneg %p52
        $region30: #{tpu_custom_call.1} parent=27 // pred_check_branch
          %243 = sbr.rel (%p241) target = $region32
        $region31: #{tpu_custom_call.1} parent=27 // pred_region
          %p244 = scmp.lt.s32.totalorder %s27, 1
          %s245 = scalar_select %p244, %s27, 1
          %s246 = smul.addr %s245, 4
          %s247 = smul.addr %s246, 4
          %s248 = scalar_lea.vmem %s0, %s247
        $region32: #{tpu_custom_call.1} parent=27 // pred_fallthru
          _
        // Predicated region
        $region33: #{tpu_custom_call.1} parent=27 // pred_check
          %p249 = pneg %p78
        $region34: #{tpu_custom_call.1} parent=27 // pred_check_branch
          %251 = sbr.rel (%p249) target = $region36
        $region35: #{tpu_custom_call.1} parent=27 // pred_region
          %p252 = scmp.lt.s32.totalorder %s27, 1
          %s253 = scalar_select %p252, %s27, 1
          %s254 = smul.addr %s253, 4
          %s255 = smul.addr %s254, 4
          %s256 = scalar_lea.vmem %s1, %s255
        $region36: #{tpu_custom_call.1} parent=27 // pred_fallthru
          _
      $region28: #{tpu_custom_call.1} parent=5 // pred_fallthru
        _
      %p257 = scmp.le.s32.totalorder 1, %s20
      %p258 = scmp.lt.s32.totalorder %s20, 3
      %p259 = pnand %p257, %p258
      %p260 = pneg %p259
      // Predicated region
      $region37: #{tpu_custom_call.1} parent=5 // pred_check
        _
      $region38: #{tpu_custom_call.1} parent=5 // pred_check_branch
        %262 = sbr.rel (%p259) target = $region40
      $region39: #{tpu_custom_call.1} parent=5 // pred_region
        %s263 = ssub.s32 %s20, 1
        // Predicated region
        $region41: #{tpu_custom_call.1} parent=39 // pred_check
          %p264 = pneg %p126
        $region42: #{tpu_custom_call.1} parent=39 // pred_check_branch
          %266 = sbr.rel (%p264) target = $region44
        $region43: #{tpu_custom_call.1} parent=39 // pred_region
          %267 = dma.done [#allocation3], 512
        $region44: #{tpu_custom_call.1} parent=39 // pred_fallthru
          _
        %p268 = scmp.lt.s32.totalorder %s29, 1
        %s269 = scalar_select %p268, %s29, 1
        %s270 = smul.addr %s269, 4
        %s271 = smul.addr %s270, 4
        %s272 = scalar_lea.vmem %s0, %s271
        %p273 = pneg %p58
        %p274 = pneg %p55
        %p275 = scmp.lt.s32.totalorder %s29, 1
        %s276 = scalar_select %p275, %s29, 1
        %s277 = smul.addr %s276, 4
        %s278 = smul.addr %s277, 4
        %s279 = scalar_lea.vmem %s1, %s278
        %p280 = pneg %p84
        %p281 = pneg %p81
        %p282 = pneg %p105
        %p283 = pneg %p102
        %p284 = pneg %p126
        %p285 = pneg %p123
        %p286 = pneg %p147
        %p287 = pneg %p144
        %p288 = pneg %p175
        %p289 = pneg %p172
        %s290 = sand.u32 %s162, 1
        %s291 = scalar_lea.sflag [#allocation4], %s290
        %s292 = sand.u32 %s162, 1
        %s293 = smul.addr %s292, 16
        %s294 = scalar_lea.vmem [#allocation5], %s293
        %p295 = pneg %p203
        %p296 = pneg %p200
        %s297 = sand.u32 %s190, 1
        %s298 = scalar_lea.sflag [#allocation7], %s297
        %s299 = sand.u32 %s190, 1
        %s300 = smul.addr %s299, 16
        %s301 = scalar_lea.vmem [#allocation6], %s300
        %p302 = scmp.lt.s32.totalorder %s29, 1
        %s303 = scalar_select %p302, %s29, 1
        %s304 = smul.addr %s303, 4
        %s305 = smul.addr %s304, 4
        %s306 = scalar_lea.vmem %s0, %s305
        %p307 = scmp.lt.s32.totalorder %s29, 1
        %s308 = scalar_select %p307, %s29, 1
        %s309 = smul.addr %s308, 4
        %s310 = smul.addr %s309, 4
        %s311 = scalar_lea.vmem %s1, %s310
        %s313 = smul.u32 %s30, 128
        %s314 = sshra.s32 %s313, 7
        %s315 = sand.u32 %s313, 127
        %s316 = smul.addr %s314, 4
        %s317 = scalar_lea.vmem %s306, %s316
        %v318 = vld [vmem:[%s317] sm:$0xff]
        %v319 = vld [vmem:[%s317 + $0x8] sm:$0xff]
        %v320 = vld [vmem:[%s2] sm:$0xf]
        %v321 = vld [vmem:[%s2 + $0x4] sm:$0xf]
        %v322 = vld [vmem:[%s2 + $0x8] sm:$0xf]
        %v323 = vld [vmem:[%s2 + $0xc] sm:$0xf]
        %v328 = vunpack.c.l.b16 %v320
        %v329 = vunpack.c.l.b16 %v321
        %v330 = vunpack.c.l.b16 %v322
        %v331 = vunpack.c.l.b16 %v323
        %v332 = vpack.c.b16 %v329, %v328
        %v333 = vpack.c.b16 %v331, %v330
        %v336 = vunpack.c.l.b16 %v318
        %v337 = vunpack.c.h.b16 %v318
        %v338 = vunpack.c.l.b16 %v319
        %v339 = vunpack.c.h.b16 %v319
        %v340 = vpack.c.b16 %v338, %v336
        %v341 = vpack.c.b16 %v339, %v337
        %342 = vrot.lane.b32.xlu0 %v340, 127
        %v343 = vpop.permute.xlu0 %342
        %344 = vrot.lane.b32.xlu0 %v341, 127
        %v345 = vpop.permute.xlu0 %344
        %vm346 = vcmask 1039360
        %v347 = vsel %vm346, %v343, %v345
        %vm349 = vcmask 130048
        %v351 = vsel %vm349, %v332, 0
        %v354 = vsel %vm349, %v333, 0
        %356 = vmatprep.subr.bf16.mxu0 0
        %357 = vmatpush1.bf16.msra.mxu0 0
        %358 = vmatprep.subr.bf16.mxu0 0
        %359 = vmatpush1.bf16.msra.mxu0 0
        %360 = vmatprep.subr.bf16.mxu0 0
        %361 = vmatpush1.bf16.msra.mxu0 0
        %362 = vmatprep.subr.bf16.mxu0 0
        %363 = vmatpush1.bf16.msra.mxu0 0
        %364 = vmatprep.subr.bf16.mxu0 0
        %365 = vmatpush1.bf16.msra.mxu0 0
        %366 = vmatprep.subr.bf16.mxu0 0
        %367 = vmatpush1.bf16.msra.mxu0 0
        %368 = vmatprep.subr.bf16.mxu0 0
        %369 = vmatpush1.bf16.msra.mxu0 0
        %370 = vmatprep.subr.bf16.mxu0 0
        %371 = vmatpush1.bf16.msra.mxu0 %v347
        %372 = vmatprep.subr.bf16.mxu0 0
        %373 = vmatpush2.bf16.msra.mxu0 0
        %374 = vmatprep.subr.bf16.mxu0 0
        %375 = vmatpush2.bf16.msra.mxu0 0
        %376 = vmatprep.subr.bf16.mxu0 0
        %377 = vmatpush2.bf16.msra.mxu0 0
        %378 = vmatprep.subr.bf16.mxu0 0
        %379 = vmatpush2.bf16.msra.mxu0 0
        %380 = vmatprep.subr.bf16.mxu0 0
        %381 = vmatpush2.bf16.msra.mxu0 0
        %382 = vmatprep.subr.bf16.mxu0 0
        %383 = vmatpush2.bf16.msra.mxu0 0
        %384 = vmatprep.subr.bf16.mxu0 0
        %385 = vmatpush2.bf16.msra.mxu0 0
        %386 = vmatprep.subr.bf16.mxu0 0
        %387 = vmatpush2.bf16.msra.mxu0 0
        %388 = vmatprep.mubr.bf16.mxu0 0
        %389 = vmatmul.mubr.bf16.gmra.mxu0 %v351
        %v390 = vpop.f32.mrf.mxu0
        %v391 = vadd.f32 0.0, %v390
        %v392 = vpop.f32.mrf.mxu0
        %v393 = vpop.f32.mrf.mxu0
        %v394 = vadd.f32 0.0, %v393
        %v395 = vpop.f32.mrf.mxu0
        %396 = vmatprep.mubr.bf16.mxu0 0
        %397 = vmatmul.mubr.bf16.gmra.mxu0 %v354
        %v398 = vpop.f32.mrf.mxu0
        %v399 = vadd.f32 0.0, %v398
        %v400 = vpop.f32.mrf.mxu0
        %v401 = vpop.f32.mrf.mxu0
        %v402 = vadd.f32 0.0, %v401
        %v403 = vpop.f32.mrf.mxu0
        %404 = vdwg.mxu0
        %v405 = vld [vmem:[#allocation2] sm:$0xf]
        %v406 = vld [vmem:[#allocation2 + $0x4] sm:$0xf]
        %v409 = vunpack.c.l.b16 %v405
        %v410 = vunpack.c.l.b16 %v406
        %v411 = vpack.c.b16 %v410, %v409
        %v414 = vsel %vm349, %v411, 0
        %416 = vmatprep.subr.bf16.mxu0 0
        %417 = vmatpush1.bf16.msra.mxu0 0
        %418 = vmatprep.subr.bf16.mxu0 0
        %419 = vmatpush1.bf16.msra.mxu0 0
        %420 = vmatprep.subr.bf16.mxu0 0
        %421 = vmatpush1.bf16.msra.mxu0 0
        %422 = vmatprep.subr.bf16.mxu0 0
        %423 = vmatpush1.bf16.msra.mxu0 0
        %424 = vmatprep.subr.bf16.mxu0 0
        %425 = vmatpush1.bf16.msra.mxu0 0
        %426 = vmatprep.subr.bf16.mxu0 0
        %427 = vmatpush1.bf16.msra.mxu0 0
        %428 = vmatprep.subr.bf16.mxu0 0
        %429 = vmatpush1.bf16.msra.mxu0 0
        %430 = vmatprep.subr.bf16.mxu0 0
        %431 = vmatpush1.bf16.msra.mxu0 %v340
        %432 = vmatprep.subr.bf16.mxu0 0
        %433 = vmatpush2.bf16.msra.mxu0 0
        %434 = vmatprep.subr.bf16.mxu0 0
        %435 = vmatpush2.bf16.msra.mxu0 0
        %436 = vmatprep.subr.bf16.mxu0 0
        %437 = vmatpush2.bf16.msra.mxu0 0
        %438 = vmatprep.subr.bf16.mxu0 0
        %439 = vmatpush2.bf16.msra.mxu0 0
        %440 = vmatprep.subr.bf16.mxu0 0
        %441 = vmatpush2.bf16.msra.mxu0 0
        %442 = vmatprep.subr.bf16.mxu0 0
        %443 = vmatpush2.bf16.msra.mxu0 0
        %444 = vmatprep.subr.bf16.mxu0 0
        %445 = vmatpush2.bf16.msra.mxu0 0
        %446 = vmatprep.subr.bf16.mxu0 0
        %447 = vmatpush2.bf16.msra.mxu0 0
        %448 = vmatprep.mubr.bf16.mxu0 0
        %449 = vmatmul.mubr.bf16.gmra.mxu0 %v414
        %v450 = vpop.f32.mrf.mxu0
        %v451 = vadd.f32 0.0, %v450
        %v452 = vpop.f32.mrf.mxu0
        %v453 = vpop.f32.mrf.mxu0
        %v454 = vadd.f32 0.0, %v453
        %v455 = vpop.f32.mrf.mxu0
        %456 = vdwg.mxu0
        %s457 = scalar_lea.vmem [#allocation2], 8
        %v458 = vld [vmem:[%s457] sm:$0xf]
        %v459 = vld [vmem:[%s457 + $0x4] sm:$0xf]
        %v462 = vunpack.c.l.b16 %v458
        %v463 = vunpack.c.l.b16 %v459
        %v464 = vpack.c.b16 %v463, %v462
        %465 = vrot.lane.b32.xlu0 %v340, 126
        %v466 = vpop.permute.xlu0 %465
        %467 = vrot.lane.b32.xlu0 %v341, 126
        %v468 = vpop.permute.xlu0 %467
        %vm469 = vcmask 1031168
        %v470 = vsel %vm469, %v466, %v468
        %v473 = vsel %vm349, %v464, 0
        %475 = vmatprep.subr.bf16.mxu0 0
        %476 = vmatpush1.bf16.msra.mxu0 0
        %477 = vmatprep.subr.bf16.mxu0 0
        %478 = vmatpush1.bf16.msra.mxu0 0
        %479 = vmatprep.subr.bf16.mxu0 0
        %480 = vmatpush1.bf16.msra.mxu0 0
        %481 = vmatprep.subr.bf16.mxu0 0
        %482 = vmatpush1.bf16.msra.mxu0 0
        %483 = vmatprep.subr.bf16.mxu0 0
        %484 = vmatpush1.bf16.msra.mxu0 0
        %485 = vmatprep.subr.bf16.mxu0 0
        %486 = vmatpush1.bf16.msra.mxu0 0
        %487 = vmatprep.subr.bf16.mxu0 0
        %488 = vmatpush1.bf16.msra.mxu0 0
        %489 = vmatprep.subr.bf16.mxu0 0
        %490 = vmatpush1.bf16.msra.mxu0 %v470
        %491 = vmatprep.subr.bf16.mxu0 0
        %492 = vmatpush2.bf16.msra.mxu0 0
        %493 = vmatprep.subr.bf16.mxu0 0
        %494 = vmatpush2.bf16.msra.mxu0 0
        %495 = vmatprep.subr.bf16.mxu0 0
        %496 = vmatpush2.bf16.msra.mxu0 0
        %497 = vmatprep.subr.bf16.mxu0 0
        %498 = vmatpush2.bf16.msra.mxu0 0
        %499 = vmatprep.subr.bf16.mxu0 0
        %500 = vmatpush2.bf16.msra.mxu0 0
        %501 = vmatprep.subr.bf16.mxu0 0
        %502 = vmatpush2.bf16.msra.mxu0 0
        %503 = vmatprep.subr.bf16.mxu0 0
        %504 = vmatpush2.bf16.msra.mxu0 0
        %505 = vmatprep.subr.bf16.mxu0 0
        %506 = vmatpush2.bf16.msra.mxu0 0
        %507 = vmatprep.mubr.bf16.mxu0 0
        %508 = vmatmul.mubr.bf16.gmra.mxu0 %v473
        %v509 = vpop.f32.mrf.mxu0
        %v510 = vadd.f32 0.0, %v509
        %v511 = vpop.f32.mrf.mxu0
        %v512 = vpop.f32.mrf.mxu0
        %v513 = vadd.f32 0.0, %v512
        %v514 = vpop.f32.mrf.mxu0
        %515 = vdwg.mxu0
        %v516 = vadd.f32 %v391, %v451
        %v517 = vadd.f32 %v394, %v454
        %v518 = vadd.f32 %v516, %v510
        %v519 = vadd.f32 %v517, %v513
        %v520 = vld [vmem:[%s4] sm:$0xff]
        %v521 = vld [vmem:[%s4 + $0x8] sm:$0xff]
        %523 = vset.pattern.permute.xlu0 0
        %524 = vperm.xlu0 %523, %v520
        %v525 = vpop.permute.xlu0 %524
        %528 = vset.pattern.permute.xlu0 0
        %529 = vperm.xlu0 %528, %v521
        %v530 = vpop.permute.xlu0 %529
        %v532 = vadd.f32 %v518, %v525
        %v533 = vadd.f32 %v519, %v530
        %v534 = vmax.f32 %v532, 0.0
        %v535 = vmax.f32 %v533, 0.0
        %v536 = vadd.f32 %v534, %v399
        %v537 = vadd.f32 %v535, %v402
        %538 = vst [vmem:[%s294] sm:$0xff] %v536
        %539 = vst [vmem:[%s294 + $0x8] sm:$0xff] %v537
        %s540 = smul.addr %s314, 4
        %s541 = scalar_lea.vmem %s311, %s540
        %v542 = vld [vmem:[%s541] sm:$0xff]
        %v543 = vld [vmem:[%s541 + $0x8] sm:$0xff]
        %s544 = scalar_lea.vmem %s2, 16
        %v545 = vld [vmem:[%s544] sm:$0xf]
        %v546 = vld [vmem:[%s544 + $0x4] sm:$0xf]
        %v547 = vld [vmem:[%s544 + $0x8] sm:$0xf]
        %v548 = vld [vmem:[%s544 + $0xc] sm:$0xf]
        %v553 = vunpack.c.l.b16 %v545
        %v554 = vunpack.c.l.b16 %v546
        %v555 = vunpack.c.l.b16 %v547
        %v556 = vunpack.c.l.b16 %v548
        %v557 = vpack.c.b16 %v554, %v553
        %v558 = vpack.c.b16 %v556, %v555
        %v561 = vunpack.c.l.b16 %v542
        %v562 = vunpack.c.h.b16 %v542
        %v563 = vunpack.c.l.b16 %v543
        %v564 = vunpack.c.h.b16 %v543
        %v565 = vpack.c.b16 %v563, %v561
        %v566 = vpack.c.b16 %v564, %v562
        %567 = vrot.lane.b32.xlu0 %v565, 127
        %v568 = vpop.permute.xlu0 %567
        %569 = vrot.lane.b32.xlu0 %v566, 127
        %v570 = vpop.permute.xlu0 %569
        %v571 = vsel %vm346, %v568, %v570
        %v574 = vsel %vm349, %v557, 0
        %v577 = vsel %vm349, %v558, 0
        %579 = vmatprep.subr.bf16.mxu0 0
        %580 = vmatpush1.bf16.msra.mxu0 0
        %581 = vmatprep.subr.bf16.mxu0 0
        %582 = vmatpush1.bf16.msra.mxu0 0
        %583 = vmatprep.subr.bf16.mxu0 0
        %584 = vmatpush1.bf16.msra.mxu0 0
        %585 = vmatprep.subr.bf16.mxu0 0
        %586 = vmatpush1.bf16.msra.mxu0 0
        %587 = vmatprep.subr.bf16.mxu0 0
        %588 = vmatpush1.bf16.msra.mxu0 0
        %589 = vmatprep.subr.bf16.mxu0 0
        %590 = vmatpush1.bf16.msra.mxu0 0
        %591 = vmatprep.subr.bf16.mxu0 0
        %592 = vmatpush1.bf16.msra.mxu0 0
        %593 = vmatprep.subr.bf16.mxu0 0
        %594 = vmatpush1.bf16.msra.mxu0 %v571
        %595 = vmatprep.subr.bf16.mxu0 0
        %596 = vmatpush2.bf16.msra.mxu0 0
        %597 = vmatprep.subr.bf16.mxu0 0
        %598 = vmatpush2.bf16.msra.mxu0 0
        %599 = vmatprep.subr.bf16.mxu0 0
        %600 = vmatpush2.bf16.msra.mxu0 0
        %601 = vmatprep.subr.bf16.mxu0 0
        %602 = vmatpush2.bf16.msra.mxu0 0
        %603 = vmatprep.subr.bf16.mxu0 0
        %604 = vmatpush2.bf16.msra.mxu0 0
        %605 = vmatprep.subr.bf16.mxu0 0
        %606 = vmatpush2.bf16.msra.mxu0 0
        %607 = vmatprep.subr.bf16.mxu0 0
        %608 = vmatpush2.bf16.msra.mxu0 0
        %609 = vmatprep.subr.bf16.mxu0 0
        %610 = vmatpush2.bf16.msra.mxu0 0
        %611 = vmatprep.mubr.bf16.mxu0 0
        %612 = vmatmul.mubr.bf16.gmra.mxu0 %v574
        %v613 = vpop.f32.mrf.mxu0
        %v614 = vadd.f32 0.0, %v613
        %v615 = vpop.f32.mrf.mxu0
        %v616 = vpop.f32.mrf.mxu0
        %v617 = vadd.f32 0.0, %v616
        %v618 = vpop.f32.mrf.mxu0
        %619 = vmatprep.mubr.bf16.mxu0 0
        %620 = vmatmul.mubr.bf16.gmra.mxu0 %v577
        %v621 = vpop.f32.mrf.mxu0
        %v622 = vadd.f32 0.0, %v621
        %v623 = vpop.f32.mrf.mxu0
        %v624 = vpop.f32.mrf.mxu0
        %v625 = vadd.f32 0.0, %v624
        %v626 = vpop.f32.mrf.mxu0
        %627 = vdwg.mxu0
        %s628 = scalar_lea.vmem [#allocation2], 16
        %v629 = vld [vmem:[%s628] sm:$0xf]
        %v630 = vld [vmem:[%s628 + $0x4] sm:$0xf]
        %v633 = vunpack.c.l.b16 %v629
        %v634 = vunpack.c.l.b16 %v630
        %v635 = vpack.c.b16 %v634, %v633
        %v638 = vsel %vm349, %v635, 0
        %640 = vmatprep.subr.bf16.mxu0 0
        %641 = vmatpush1.bf16.msra.mxu0 0
        %642 = vmatprep.subr.bf16.mxu0 0
        %643 = vmatpush1.bf16.msra.mxu0 0
        %644 = vmatprep.subr.bf16.mxu0 0
        %645 = vmatpush1.bf16.msra.mxu0 0
        %646 = vmatprep.subr.bf16.mxu0 0
        %647 = vmatpush1.bf16.msra.mxu0 0
        %648 = vmatprep.subr.bf16.mxu0 0
        %649 = vmatpush1.bf16.msra.mxu0 0
        %650 = vmatprep.subr.bf16.mxu0 0
        %651 = vmatpush1.bf16.msra.mxu0 0
        %652 = vmatprep.subr.bf16.mxu0 0
        %653 = vmatpush1.bf16.msra.mxu0 0
        %654 = vmatprep.subr.bf16.mxu0 0
        %655 = vmatpush1.bf16.msra.mxu0 %v565
        %656 = vmatprep.subr.bf16.mxu0 0
        %657 = vmatpush2.bf16.msra.mxu0 0
        %658 = vmatprep.subr.bf16.mxu0 0
        %659 = vmatpush2.bf16.msra.mxu0 0
        %660 = vmatprep.subr.bf16.mxu0 0
        %661 = vmatpush2.bf16.msra.mxu0 0
        %662 = vmatprep.subr.bf16.mxu0 0
        %663 = vmatpush2.bf16.msra.mxu0 0
        %664 = vmatprep.subr.bf16.mxu0 0
        %665 = vmatpush2.bf16.msra.mxu0 0
        %666 = vmatprep.subr.bf16.mxu0 0
        %667 = vmatpush2.bf16.msra.mxu0 0
        %668 = vmatprep.subr.bf16.mxu0 0
        %669 = vmatpush2.bf16.msra.mxu0 0
        %670 = vmatprep.subr.bf16.mxu0 0
        %671 = vmatpush2.bf16.msra.mxu0 0
        %672 = vmatprep.mubr.bf16.mxu0 0
        %673 = vmatmul.mubr.bf16.gmra.mxu0 %v638
        %v674 = vpop.f32.mrf.mxu0
        %v675 = vadd.f32 0.0, %v674
        %v676 = vpop.f32.mrf.mxu0
        %v677 = vpop.f32.mrf.mxu0
        %v678 = vadd.f32 0.0, %v677
        %v679 = vpop.f32.mrf.mxu0
        %680 = vdwg.mxu0
        %s681 = scalar_lea.vmem [#allocation2], 24
        %v682 = vld [vmem:[%s681] sm:$0xf]
        %v683 = vld [vmem:[%s681 + $0x4] sm:$0xf]
        %v686 = vunpack.c.l.b16 %v682
        %v687 = vunpack.c.l.b16 %v683
        %v688 = vpack.c.b16 %v687, %v686
        %689 = vrot.lane.b32.xlu0 %v565, 126
        %v690 = vpop.permute.xlu0 %689
        %691 = vrot.lane.b32.xlu0 %v566, 126
        %v692 = vpop.permute.xlu0 %691
        %v693 = vsel %vm469, %v690, %v692
        %v696 = vsel %vm349, %v688, 0
        %698 = vmatprep.subr.bf16.mxu0 0
        %699 = vmatpush1.bf16.msra.mxu0 0
        %700 = vmatprep.subr.bf16.mxu0 0
        %701 = vmatpush1.bf16.msra.mxu0 0
        %702 = vmatprep.subr.bf16.mxu0 0
        %703 = vmatpush1.bf16.msra.mxu0 0
        %704 = vmatprep.subr.bf16.mxu0 0
        %705 = vmatpush1.bf16.msra.mxu0 0
        %706 = vmatprep.subr.bf16.mxu0 0
        %707 = vmatpush1.bf16.msra.mxu0 0
        %708 = vmatprep.subr.bf16.mxu0 0
        %709 = vmatpush1.bf16.msra.mxu0 0
        %710 = vmatprep.subr.bf16.mxu0 0
        %711 = vmatpush1.bf16.msra.mxu0 0
        %712 = vmatprep.subr.bf16.mxu0 0
        %713 = vmatpush1.bf16.msra.mxu0 %v693
        %714 = vmatprep.subr.bf16.mxu0 0
        %715 = vmatpush2.bf16.msra.mxu0 0
        %716 = vmatprep.subr.bf16.mxu0 0
        %717 = vmatpush2.bf16.msra.mxu0 0
        %718 = vmatprep.subr.bf16.mxu0 0
        %719 = vmatpush2.bf16.msra.mxu0 0
        %720 = vmatprep.subr.bf16.mxu0 0
        %721 = vmatpush2.bf16.msra.mxu0 0
        %722 = vmatprep.subr.bf16.mxu0 0
        %723 = vmatpush2.bf16.msra.mxu0 0
        %724 = vmatprep.subr.bf16.mxu0 0
        %725 = vmatpush2.bf16.msra.mxu0 0
        %726 = vmatprep.subr.bf16.mxu0 0
        %727 = vmatpush2.bf16.msra.mxu0 0
        %728 = vmatprep.subr.bf16.mxu0 0
        %729 = vmatpush2.bf16.msra.mxu0 0
        %730 = vmatprep.mubr.bf16.mxu0 0
        %731 = vmatmul.mubr.bf16.gmra.mxu0 %v696
        %v732 = vpop.f32.mrf.mxu0
        %v733 = vadd.f32 0.0, %v732
        %v734 = vpop.f32.mrf.mxu0
        %v735 = vpop.f32.mrf.mxu0
        %v736 = vadd.f32 0.0, %v735
        %v737 = vpop.f32.mrf.mxu0
        %738 = vdwg.mxu0
        %v739 = vadd.f32 %v614, %v675
        %v740 = vadd.f32 %v617, %v678
        %v741 = vadd.f32 %v739, %v733
        %v742 = vadd.f32 %v740, %v736
        %s743 = scalar_lea.vmem %s4, 16
        %v744 = vld [vmem:[%s743] sm:$0xff]
        %v745 = vld [vmem:[%s743 + $0x8] sm:$0xff]
        %747 = vset.pattern.permute.xlu0 0
        %748 = vperm.xlu0 %747, %v744
        %v749 = vpop.permute.xlu0 %748
        %752 = vset.pattern.permute.xlu0 0
        %753 = vperm.xlu0 %752, %v745
        %v754 = vpop.permute.xlu0 %753
        %v756 = vadd.f32 %v741, %v749
        %v757 = vadd.f32 %v742, %v754
        %v758 = vmax.f32 %v756, 0.0
        %v759 = vmax.f32 %v757, 0.0
        %v760 = vadd.f32 %v758, %v622
        %v761 = vadd.f32 %v759, %v625
        %762 = vst [vmem:[%s301] sm:$0xff] %v760
        %763 = vst [vmem:[%s301 + $0x8] sm:$0xff] %v761
        %s764 = sand.u32 %s162, 1
        %s765 = scalar_lea.sflag [#allocation4], %s764
        %s766 = sand.u32 %s162, 1
        %s767 = smul.addr %s766, 16
        %s768 = scalar_lea.vmem [#allocation5], %s767
        %s769 = sand.u32 %s190, 1
        %s770 = scalar_lea.sflag [#allocation7], %s769
        %s771 = sand.u32 %s190, 1
        %s772 = smul.addr %s771, 16
        %s773 = scalar_lea.vmem [#allocation6], %s772
        // Predicated region
        $region45: #{tpu_custom_call.1} parent=39 // pred_check
          %p774 = pneg %p172
        $region46: #{tpu_custom_call.1} parent=39 // pred_check_branch
          %776 = sbr.rel (%p774) target = $region48
        $region47: #{tpu_custom_call.1} parent=39 // pred_region
          %s778 = ssub.s32 256, 256
          %779 = vsyncadd %s765, %s778
          %s780 = smul.addr %s29, 2
          %s781 = sadd.s32 %s30, %s780
          %s782 = smul.addr %s781, 128
          %s783 = scalar_lea.hbm %s5, %s782
          %s784 = sshll.u32 %s768, 4
          %s785 = int_to_ptr.vmem [resolvable:$true] %s784
          %790 = dma.vmem_to_hbm [thread:$0]  %s785, 256, %s783, %s765, 128, 128, 8
        $region48: #{tpu_custom_call.1} parent=39 // pred_fallthru
          _
        // Predicated region
        $region49: #{tpu_custom_call.1} parent=39 // pred_check
          %p791 = pneg %p200
        $region50: #{tpu_custom_call.1} parent=39 // pred_check_branch
          %793 = sbr.rel (%p791) target = $region52
        $region51: #{tpu_custom_call.1} parent=39 // pred_region
          %s795 = ssub.s32 256, 256
          %796 = vsyncadd %s770, %s795
          %s797 = smul.addr %s29, 2
          %s798 = sadd.s32 %s30, %s797
          %s799 = smul.addr %s798, 128
          %s800 = scalar_lea.hbm %s6, %s799
          %s801 = sshll.u32 %s773, 4
          %s802 = int_to_ptr.vmem [resolvable:$true] %s801
          %807 = dma.vmem_to_hbm [thread:$0]  %s802, 256, %s800, %s770, 128, 128, 8
        $region52: #{tpu_custom_call.1} parent=39 // pred_fallthru
          _
      $region40: #{tpu_custom_call.1} parent=5 // pred_fallthru
        _
      %p808 = scmp.le.s32.totalorder 2, %s20
      // Predicated region
      $region53: #{tpu_custom_call.1} parent=5 // pred_check
        %p809 = pneg %p808
      $region54: #{tpu_custom_call.1} parent=5 // pred_check_branch
        %811 = sbr.rel (%p809) target = $region56
      $region55: #{tpu_custom_call.1} parent=5 // pred_region
        %s812 = ssub.s32 %s20, 2
        // Predicated region
        $region57: #{tpu_custom_call.1} parent=55 // pred_check
          %p813 = pneg %p178
        $region58: #{tpu_custom_call.1} parent=55 // pred_check_branch
          %815 = sbr.rel (%p813) target = $region60
        $region59: #{tpu_custom_call.1} parent=55 // pred_region
          %s816 = sand.u32 %s163, 1
          %s817 = scalar_lea.sflag [#allocation4], %s816
          %s818 = sand.u32 %s163, 1
          %s819 = smul.addr %s818, 16
          %s820 = scalar_lea.vmem [#allocation5], %s819
          %821 = dma.done %s817, 256
        $region60: #{tpu_custom_call.1} parent=55 // pred_fallthru
          _
        // Predicated region
        $region61: #{tpu_custom_call.1} parent=55 // pred_check
          %p822 = pneg %p206
        $region62: #{tpu_custom_call.1} parent=55 // pred_check_branch
          %824 = sbr.rel (%p822) target = $region64
        $region63: #{tpu_custom_call.1} parent=55 // pred_region
          %s825 = sand.u32 %s191, 1
          %s826 = scalar_lea.sflag [#allocation7], %s825
          %s827 = sand.u32 %s191, 1
          %s828 = smul.addr %s827, 16
          %s829 = scalar_lea.vmem [#allocation6], %s828
          %830 = dma.done %s826, 256
        $region64: #{tpu_custom_call.1} parent=55 // pred_fallthru
          _
      $region56: #{tpu_custom_call.1} parent=5 // pred_fallthru
        _
    $region6: #{tpu_custom_call.1} parent=1 // loop_footer
      %s24 = sadd.s32 1, %s20
    $region7: #{tpu_custom_call.1} parent=1 // loop_footer_branch
      %19 = sbr.rel target = $region3
    $region8: #{tpu_custom_call.1} parent=1 // loop_exit
      _
    %831 = vsyncpa [#allocation3], 1
    %s832 = scalar_lea.sflag [#allocation3], 1
    %833 = vsyncpa %s832, 1
    %834 = vsyncpa [#allocation4], 1
    %s835 = scalar_lea.sflag [#allocation4], 1
    %836 = vsyncpa %s835, 1
    %837 = vsyncpa [#allocation7], 1
    %s838 = scalar_lea.sflag [#allocation7], 1
    %839 = vsyncpa %s838, 1

</llo_original>
